<compile_context>
chip_gen: v7x
topology: tpu7x:2x2x1
jax: 0.10.0
libtpu: 0.0.40
codegen_flags: <defaults>
</compile_context>

<pallas_src>
import jax
import jax.numpy as jnp
from jax.experimental import pallas as pl
from jax.experimental.pallas import tpu as pltpu


def _make_kernel(seq_tile, total_seq, needs_mask):
    """Build the kernel body with trace-time constants closed over."""

    def kernel(x_ref, a_ref, w_ref, b_ref, out_ref, m_sc, l_sc, acc_sc):
        # x_ref   : (TB, TS, F) feature tile (input dtype, streamed from HBM)
        # a_ref   : (F, 1)      attention column (VMEM resident)
        # w_ref   : (F, D)      linear weight (VMEM resident)
        # b_ref   : (1, D)      linear bias (VMEM resident)
        # out_ref : (TB, D)     log-softmax output tile (written on last step)
        # m_sc, l_sc : (TB, 1)  online-softmax running max / denominator (f32)
        # acc_sc  : (TB, F)     running softmax-weighted feature sum (f32)
        s_idx = pl.program_id(1)

        @pl.when(s_idx == 0)
        def _():
            m_sc[...] = jnp.full_like(m_sc, -jnp.inf)
            l_sc[...] = jnp.zeros_like(l_sc)
            acc_sc[...] = jnp.zeros_like(acc_sc)

        x = x_ref[...]                                   # (TB, TS, F)
        tb, ts, f = x.shape

        if needs_mask:
            # Positions past the real sequence length (last, partial block):
            # zero their features and force their scores to -inf so they
            # contribute exactly nothing (p = 0) to the online softmax.
            pos = jax.lax.broadcasted_iota(jnp.int32, (tb, ts), 1) + s_idx * seq_tile
            valid = pos < total_seq                      # (TB, TS) bool
            x = jnp.where(valid[:, :, None], x, jnp.zeros_like(x))

        # --- attention scores: single MXU matvec -----------------------------
        # Stationary operand is the tiny (F, 1) attention column; TB*TS rows of
        # x stream through.  f32 accumulation via preferred_element_type.
        a_col = a_ref[...].astype(x.dtype)               # (F, 1)
        s_blk = jnp.dot(x.reshape(tb * ts, f), a_col,
                        preferred_element_type=jnp.float32)   # (TB*TS, 1) f32
        s_blk = s_blk.reshape(tb, ts)                    # (TB, TS) f32

        if needs_mask:
            s_blk = jnp.where(valid, s_blk, -jnp.inf)

        # --- online softmax over the sequence (grid axis 1) ------------------
        m_prev = m_sc[...]                                                 # (TB, 1)
        m_new = jnp.maximum(m_prev, jnp.max(s_blk, axis=-1, keepdims=True))
        alpha = jnp.exp(m_prev - m_new)                                    # (TB, 1)
        p = jnp.exp(s_blk - m_new)                                         # (TB, TS) f32

        l_sc[...] = alpha * l_sc[...] + jnp.sum(p, axis=-1, keepdims=True)

        # --- softmax-weighted feature sum on the VPU --------------------------
        # p stays f32; x promotes to f32 in the multiply, reduce over TS
        # (sublane axis) accumulates in f32.  No (TB,TS,F) f32 temporary cast.
        contrib = jnp.sum(x * p[:, :, None], axis=1)                       # (TB, F) f32
        acc_sc[...] = alpha * acc_sc[...] + contrib
        m_sc[...] = m_new

        @pl.when(s_idx == pl.num_programs(1) - 1)
        def _():
            condensed = acc_sc[...] / l_sc[...]                            # (TB, F) f32
            logits = jnp.dot(condensed, w_ref[...].astype(jnp.float32),
                             preferred_element_type=jnp.float32)
            logits = logits + b_ref[...].astype(jnp.float32)               # (TB, D)
            lm = jnp.max(logits, axis=-1, keepdims=True)
            shifted = logits - lm
            lse = jnp.log(jnp.sum(jnp.exp(shifted), axis=-1, keepdims=True))
            out_ref[...] = (shifted - lse).astype(out_ref.dtype)

    return kernel


def _pick_batch_tile(B):
    """Multiple-of-8 divisor of B, <=128 rows, preferring an even >=2-step grid."""
    if B % 8 != 0:
        # Small / awkward batch: single tile.  For large awkward B, padding B up
        # to a multiple of 16 on the caller side restores megacore balance.
        return B
    cands = [t for t in range(8, min(B, 128) + 1, 8) if B % t == 0]
    even = [t for t in cands if (B // t) % 2 == 0]       # even grid -> both TCs busy
    if even:
        return max(even)
    multi = [t for t in cands if B // t >= 2]
    if multi:
        return max(multi)
    return B


def mlp_domain_discriminator(feature, attention, weight, bias, *,
                             batch_tile=None, seq_tile=None):
    """feature: (B, S, F); attention: (F, 1); weight: (F, D); bias: (D,)."""
    B, S, F = feature.shape
    D = weight.shape[1]
    b2d = bias.reshape(1, D)
    x_itemsize = jnp.dtype(feature.dtype).itemsize
    p_itemsize = jnp.dtype(weight.dtype).itemsize

    # ---- generation-aware VMEM budgets --------------------------------------
    try:
        vmem_cap = int(pltpu.get_tpu_info().vmem_capacity_bytes)
    except Exception:
        vmem_cap = 64 * 1024 * 1024                      # conservative fallback
    if vmem_cap <= 64 * 1024 * 1024:
        # v7x-class: 64 MiB physical per TC -> leave headroom for the compiler.
        block_budget = 8 * 1024 * 1024
        vmem_limit = 48 * 1024 * 1024
    else:
        # v5e/v6e-class: 128 MiB -> bigger blocks amortize per-step overhead.
        block_budget = 24 * 1024 * 1024
        vmem_limit = 100 * 1024 * 1024

    # ---- tile selection ------------------------------------------------------
    if batch_tile is None:
        batch_tile = _pick_batch_tile(B)
    if B % batch_tile != 0:
        batch_tile = B

    x_row_bytes = max(1, batch_tile * F * x_itemsize)    # bytes per seq position
    if seq_tile is None:
        max_ts = max(8, block_budget // x_row_bytes)
        if S <= max_ts:
            seq_tile = S                                 # whole sequence in one block
        else:
            seq_tile = max(8, (max_ts // 8) * 8)         # multiple of 8; last block masked

    def _est_vmem(ts):
        x_buf = 2 * batch_tile * ts * F * x_itemsize                 # double-buffered stream
        resident = 2 * (F + F * D + D) * p_itemsize                  # a, w, b (conservative)
        scratch = batch_tile * (F + 2) * 4
        out_buf = 2 * batch_tile * D * 4
        return x_buf + resident + scratch + out_buf

    # Explicit guard: never request more than vmem_limit (minus headroom).
    while seq_tile > 8 and _est_vmem(seq_tile) > vmem_limit - (2 << 20):
        seq_tile = max(8, ((seq_tile // 2) // 8) * 8)

    num_seq_blocks = pl.cdiv(S, seq_tile)
    needs_mask = (S % seq_tile) != 0
    grid = (B // batch_tile, num_seq_blocks)

    # ---- BlockSpecs ----------------------------------------------------------
    x_index_map = lambda b, s: (b, s, 0)
    x_spec = pl.BlockSpec((batch_tile, seq_tile, F), x_index_map)
    x_block_bytes = batch_tile * seq_tile * F * x_itemsize
    if (vmem_cap > 64 * 1024 * 1024 and num_seq_blocks >= 3
            and x_block_bytes <= 12 * 1024 * 1024):
        # Plenty of VMEM and many streamed blocks: triple-buffer the x stream
        # to hide DMA-issue / step-boundary bubbles.  Guarded for API presence.
        try:
            x_spec = pl.BlockSpec((batch_tile, seq_tile, F), x_index_map,
                                  pipeline_mode=pl.Buffered(3))
        except (TypeError, AttributeError):
            x_spec = pl.BlockSpec((batch_tile, seq_tile, F), x_index_map)

    # ---- advisory cost estimate ---------------------------------------------
    flops = 4 * B * S * F + 2 * B * F * D + 8 * B * S
    transcendentals = B * S + 2 * B * D
    bytes_accessed = (B * S * F * x_itemsize
                      + (F + F * D + D) * p_itemsize
                      + B * D * 4)
    cost = pl.CostEstimate(flops=int(flops),
                           transcendentals=int(transcendentals),
                           bytes_accessed=int(bytes_accessed))

    kernel = _make_kernel(seq_tile, S, needs_mask)

    return pl.pallas_call(
        kernel,
        out_shape=jax.ShapeDtypeStruct((B, D), jnp.float32),
        grid_spec=pltpu.PrefetchScalarGridSpec(
            num_scalar_prefetch=0,
            grid=grid,
            in_specs=[
                x_spec,
                pl.BlockSpec((F, 1), lambda b, s: (0, 0)),   # attention: resident
                pl.BlockSpec((F, D), lambda b, s: (0, 0)),   # weight: resident
                pl.BlockSpec((1, D), lambda b, s: (0, 0)),   # bias: resident
            ],
            out_specs=pl.BlockSpec((batch_tile, D), lambda b, s: (b, 0)),
            scratch_shapes=[
                pltpu.VMEM((batch_tile, 1), jnp.float32),    # running max
                pltpu.VMEM((batch_tile, 1), jnp.float32),    # running denom
                pltpu.VMEM((batch_tile, F), jnp.float32),    # weighted-sum acc
            ],
        ),
        compiler_params=pltpu.CompilerParams(
            dimension_semantics=("parallel", "arbitrary"),
            vmem_limit_bytes=int(vmem_limit),
        ),
        cost_estimate=cost,
    )(feature, attention, weight, b2d)


def _reference(feature, attention, weight, bias):
    x = feature.astype(jnp.float32)
    scores = jnp.squeeze(x @ attention, axis=-1)           # (B, S)
    p = jax.nn.softmax(scores, axis=1)
    condensed = jnp.sum(x * p[:, :, None], axis=1)
    logits = condensed @ weight + bias[None, :]
    return jax.nn.log_softmax(logits, axis=1)


if __name__ == "__main__":
    # Small shapes: batch=2, seq=8, feature_dim=32, domain_num=4.
    B, S, F, D = 2, 8, 32, 4
    key = jax.random.PRNGKey(0)
    k_x, k_a, k_w, k_b = jax.random.split(key, 4)

    feature = jax.random.normal(k_x, (B, S, F), dtype=jnp.float32)

    # attention: xavier_uniform_ on (F, 1) -> U(-a, a) with a = sqrt(6/(F+1))
    bound_a = (6.0 / (F + 1)) ** 0.5
    attention = jax.random.uniform(k_a, (F, 1), minval=-bound_a, maxval=bound_a,
                                   dtype=jnp.float32)

    # Linear(F, D): PyTorch-default-style uniform init, stored as (F, D)
    # (transpose of PyTorch's (D, F)).
    bound_w = 1.0 / (F ** 0.5)
    weight = jax.random.uniform(k_w, (F, D), minval=-bound_w, maxval=bound_w,
                                dtype=jnp.float32)
    bias = jax.random.uniform(k_b, (D,), minval=-bound_w, maxval=bound_w,
                              dtype=jnp.float32)

    out = mlp_domain_discriminator(feature, attention, weight, bias)
    out = jax.block_until_ready(out)

    ref = _reference(feature, attention, weight, bias)
    assert out.shape == (B, D)
    assert jnp.allclose(out, ref, atol=1e-5, rtol=1e-5)

    print("KERNEL_OK")
</pallas_src>

<mosaic_0001>
module attributes {stable_mosaic.version = 11 : i64} {
  func.func @kernel(%arg0: i32, %arg1: i32, %arg2: memref<2x8x32xf32, #tpu.memory_space<vmem>>, %arg3: memref<32x1xf32, #tpu.memory_space<vmem>>, %arg4: memref<32x4xf32, #tpu.memory_space<vmem>>, %arg5: memref<1x4xf32, #tpu.memory_space<vmem>>, %arg6: memref<2x4xf32, #tpu.memory_space<vmem>>, %arg7: memref<2x1xf32, #tpu.memory_space<vmem>>, %arg8: memref<2x1xf32, #tpu.memory_space<vmem>>, %arg9: memref<2x32xf32, #tpu.memory_space<vmem>>) attributes {dimension_semantics = [#tpu.dimension_semantics<parallel>, #tpu.dimension_semantics<arbitrary>], iteration_bounds = array<i64: 1, 1>, scalar_prefetch = 0 : i64, scratch_operands = 3 : i64, tpu.core_type = #tpu.core_type<tc>, window_params = [{transform_indices = @transform_0, window_bounds = array<i64: 2, 8, 32>}, {pipeline_mode = #tpu.pipeline_mode<synchronous>, transform_indices = @transform_1, window_bounds = array<i64: 32, 1>}, {pipeline_mode = #tpu.pipeline_mode<synchronous>, transform_indices = @transform_2, window_bounds = array<i64: 32, 4>}, {pipeline_mode = #tpu.pipeline_mode<synchronous>, transform_indices = @transform_3, window_bounds = array<i64: 1, 4>}, {transform_indices = @transform_4, window_bounds = array<i64: 2, 4>}]} {
    %c0_i32 = arith.constant 0 : i32
    %0 = arith.cmpi eq, %arg1, %c0_i32 : i32
    %1 = arith.extui %0 : i1 to i32
    %c0_i32_0 = arith.constant 0 : i32
    %2 = arith.cmpi ne, %1, %c0_i32_0 : i32
    scf.if %2 {
      %cst_22 = arith.constant 0xFF800000 : f32
      %36 = vector.broadcast %cst_22 : f32 to vector<2x1xf32>
      %c0_23 = arith.constant 0 : index
      %c0_24 = arith.constant 0 : index
      %37 = vector.load %arg7[%c0_23, %c0_24] : memref<2x1xf32, #tpu.memory_space<vmem>>, vector<2x1xf32>
      tpu.vector_store %arg7[%c0_23, %c0_24], %36 {strides = array<i32>} : memref<2x1xf32, #tpu.memory_space<vmem>>, vector<2x1xf32>,
      %cst_25 = arith.constant 0.000000e+00 : f32
      %38 = vector.broadcast %cst_25 : f32 to vector<2x1xf32>
      %c0_26 = arith.constant 0 : index
      %c0_27 = arith.constant 0 : index
      %39 = vector.load %arg8[%c0_26, %c0_27] : memref<2x1xf32, #tpu.memory_space<vmem>>, vector<2x1xf32>
      tpu.vector_store %arg8[%c0_26, %c0_27], %38 {strides = array<i32>} : memref<2x1xf32, #tpu.memory_space<vmem>>, vector<2x1xf32>,
      %cst_28 = arith.constant 0.000000e+00 : f32
      %40 = vector.broadcast %cst_28 : f32 to vector<2x32xf32>
      %c0_29 = arith.constant 0 : index
      %c0_30 = arith.constant 0 : index
      %41 = vector.load %arg9[%c0_29, %c0_30] : memref<2x32xf32, #tpu.memory_space<vmem>>, vector<2x32xf32>
      tpu.vector_store %arg9[%c0_29, %c0_30], %40 {strides = array<i32>} : memref<2x32xf32, #tpu.memory_space<vmem>>, vector<2x32xf32>,
    } else {
    }
    %c0 = arith.constant 0 : index
    %c0_1 = arith.constant 0 : index
    %c0_2 = arith.constant 0 : index
    %3 = vector.load %arg2[%c0, %c0_1, %c0_2] : memref<2x8x32xf32, #tpu.memory_space<vmem>>, vector<2x8x32xf32>
    %c0_3 = arith.constant 0 : index
    %c0_4 = arith.constant 0 : index
    %4 = vector.load %arg3[%c0_3, %c0_4] : memref<32x1xf32, #tpu.memory_space<vmem>>, vector<32x1xf32>
    %5 = vector.shape_cast %3 : vector<2x8x32xf32> to vector<16x32xf32>
    %cst = arith.constant dense<0.000000e+00> : vector<16x1xf32>
    %6 = tpu.matmul %5, %4, %cst {dimension_numbers = #tpu.dot_dimension_numbers<[1], [0], [0], [1], [0, 0, 1, 1], [], []>} : vector<16x32xf32>, vector<32x1xf32>, vector<16x1xf32> -> vector<16x1xf32>
    %7 = vector.shape_cast %6 : vector<16x1xf32> to vector<2x8xf32>
    %c0_5 = arith.constant 0 : index
    %c0_6 = arith.constant 0 : index
    %8 = vector.load %arg7[%c0_5, %c0_6] : memref<2x1xf32, #tpu.memory_space<vmem>>, vector<2x1xf32>
    %cst_7 = arith.constant dense<0xFF800000> : vector<2xf32>
    %9 = vector.multi_reduction <maximumf>, %7, %cst_7 [1] : vector<2x8xf32> to vector<2xf32>
    %10 = vector.shape_cast %9 : vector<2xf32> to vector<2x1xf32>
    %11 = arith.maximumf %8, %10 : vector<2x1xf32>
    %12 = arith.subf %8, %11 : vector<2x1xf32>
    %13 = math.exp %12 : vector<2x1xf32>
    %14 = vector.broadcast %11 : vector<2x1xf32> to vector<2x8xf32>
    %15 = arith.subf %7, %14 : vector<2x8xf32>
    %16 = math.exp %15 : vector<2x8xf32>
    %c0_8 = arith.constant 0 : index
    %c0_9 = arith.constant 0 : index
    %17 = vector.load %arg8[%c0_8, %c0_9] : memref<2x1xf32, #tpu.memory_space<vmem>>, vector<2x1xf32>
    %18 = arith.mulf %13, %17 : vector<2x1xf32>
    %cst_10 = arith.constant dense<0.000000e+00> : vector<2xf32>
    %19 = vector.multi_reduction <add>, %16, %cst_10 [1] : vector<2x8xf32> to vector<2xf32>
    %20 = vector.shape_cast %19 : vector<2xf32> to vector<2x1xf32>
    %21 = arith.addf %18, %20 : vector<2x1xf32>
    %c0_11 = arith.constant 0 : index
    %c0_12 = arith.constant 0 : index
    %22 = vector.load %arg8[%c0_11, %c0_12] : memref<2x1xf32, #tpu.memory_space<vmem>>, vector<2x1xf32>
    tpu.vector_store %arg8[%c0_11, %c0_12], %21 {strides = array<i32>} : memref<2x1xf32, #tpu.memory_space<vmem>>, vector<2x1xf32>,
    %23 = vector.shape_cast %16 : vector<2x8xf32> to vector<2x8x1xf32>
    %24 = vector.broadcast %23 : vector<2x8x1xf32> to vector<2x8x32xf32>
    %25 = arith.mulf %3, %24 : vector<2x8x32xf32>
    %cst_13 = arith.constant dense<0.000000e+00> : vector<2x32xf32>
    %26 = vector.multi_reduction <add>, %25, %cst_13 [1] : vector<2x8x32xf32> to vector<2x32xf32>
    %c0_14 = arith.constant 0 : index
    %c0_15 = arith.constant 0 : index
    %27 = vector.load %arg9[%c0_14, %c0_15] : memref<2x32xf32, #tpu.memory_space<vmem>>, vector<2x32xf32>
    %28 = vector.broadcast %13 : vector<2x1xf32> to vector<2x32xf32>
    %29 = arith.mulf %28, %27 : vector<2x32xf32>
    %30 = arith.addf %29, %26 : vector<2x32xf32>
    %c0_16 = arith.constant 0 : index
    %c0_17 = arith.constant 0 : index
    %31 = vector.load %arg9[%c0_16, %c0_17] : memref<2x32xf32, #tpu.memory_space<vmem>>, vector<2x32xf32>
    tpu.vector_store %arg9[%c0_16, %c0_17], %30 {strides = array<i32>} : memref<2x32xf32, #tpu.memory_space<vmem>>, vector<2x32xf32>,
    %c0_18 = arith.constant 0 : index
    %c0_19 = arith.constant 0 : index
    %32 = vector.load %arg7[%c0_18, %c0_19] : memref<2x1xf32, #tpu.memory_space<vmem>>, vector<2x1xf32>
    tpu.vector_store %arg7[%c0_18, %c0_19], %11 {strides = array<i32>} : memref<2x1xf32, #tpu.memory_space<vmem>>, vector<2x1xf32>,
    %c0_i32_20 = arith.constant 0 : i32
    %33 = arith.cmpi eq, %arg1, %c0_i32_20 : i32
    %34 = arith.extui %33 : i1 to i32
    %c0_i32_21 = arith.constant 0 : i32
    %35 = arith.cmpi ne, %34, %c0_i32_21 : i32
    scf.if %35 {
      %c0_22 = arith.constant 0 : index
      %c0_23 = arith.constant 0 : index
      %36 = vector.load %arg9[%c0_22, %c0_23] : memref<2x32xf32, #tpu.memory_space<vmem>>, vector<2x32xf32>
      %c0_24 = arith.constant 0 : index
      %c0_25 = arith.constant 0 : index
      %37 = vector.load %arg8[%c0_24, %c0_25] : memref<2x1xf32, #tpu.memory_space<vmem>>, vector<2x1xf32>
      %38 = vector.broadcast %37 : vector<2x1xf32> to vector<2x32xf32>
      %39 = arith.divf %36, %38 : vector<2x32xf32>
      %c0_26 = arith.constant 0 : index
      %c0_27 = arith.constant 0 : index
      %40 = vector.load %arg4[%c0_26, %c0_27] : memref<32x4xf32, #tpu.memory_space<vmem>>, vector<32x4xf32>
      %cst_28 = arith.constant dense<0.000000e+00> : vector<2x4xf32>
      %41 = tpu.matmul %39, %40, %cst_28 {dimension_numbers = #tpu.dot_dimension_numbers<[1], [0], [0], [1], [0, 0, 1, 1], [], []>} : vector<2x32xf32>, vector<32x4xf32>, vector<2x4xf32> -> vector<2x4xf32>
      %c0_29 = arith.constant 0 : index
      %c0_30 = arith.constant 0 : index
      %42 = vector.load %arg5[%c0_29, %c0_30] : memref<1x4xf32, #tpu.memory_space<vmem>>, vector<1x4xf32>
      %43 = vector.broadcast %42 : vector<1x4xf32> to vector<2x4xf32>
      %44 = arith.addf %41, %43 : vector<2x4xf32>
      %cst_31 = arith.constant dense<0xFF800000> : vector<2xf32>
      %45 = vector.multi_reduction <maximumf>, %44, %cst_31 [1] : vector<2x4xf32> to vector<2xf32>
      %46 = vector.shape_cast %45 : vector<2xf32> to vector<2x1xf32>
      %47 = vector.broadcast %46 : vector<2x1xf32> to vector<2x4xf32>
      %48 = arith.subf %44, %47 : vector<2x4xf32>
      %49 = math.exp %48 : vector<2x4xf32>
      %cst_32 = arith.constant dense<0.000000e+00> : vector<2xf32>
      %50 = vector.multi_reduction <add>, %49, %cst_32 [1] : vector<2x4xf32> to vector<2xf32>
      %51 = vector.shape_cast %50 : vector<2xf32> to vector<2x1xf32>
      %52 = math.log %51 : vector<2x1xf32>
      %53 = vector.broadcast %52 : vector<2x1xf32> to vector<2x4xf32>
      %54 = arith.subf %48, %53 : vector<2x4xf32>
      %c0_33 = arith.constant 0 : index
      %c0_34 = arith.constant 0 : index
      %55 = vector.load %arg6[%c0_33, %c0_34] : memref<2x4xf32, #tpu.memory_space<vmem>>, vector<2x4xf32>
      tpu.vector_store %arg6[%c0_33, %c0_34], %54 {strides = array<i32>} : memref<2x4xf32, #tpu.memory_space<vmem>>, vector<2x4xf32>,
    } else {
    }
    return
  }
  func.func @transform_0(%arg0: i32, %arg1: i32) -> (i32, i32, i32) {
    %c0_i32 = arith.constant 0 : i32
    %c0_i32_0 = arith.constant 0 : i32
    return %arg0, %arg1, %c0_i32 : i32, i32, i32
  }
  func.func @transform_1(%arg0: i32, %arg1: i32) -> (i32, i32) {
    %c0_i32 = arith.constant 0 : i32
    %c0_i32_0 = arith.constant 0 : i32
    %c0_i32_1 = arith.constant 0 : i32
    return %c0_i32, %c0_i32_0 : i32, i32
  }
  func.func @transform_2(%arg0: i32, %arg1: i32) -> (i32, i32) {
    %c0_i32 = arith.constant 0 : i32
    %c0_i32_0 = arith.constant 0 : i32
    %c0_i32_1 = arith.constant 0 : i32
    return %c0_i32, %c0_i32_0 : i32, i32
  }
  func.func @transform_3(%arg0: i32, %arg1: i32) -> (i32, i32) {
    %c0_i32 = arith.constant 0 : i32
    %c0_i32_0 = arith.constant 0 : i32
    %c0_i32_1 = arith.constant 0 : i32
    return %c0_i32, %c0_i32_0 : i32, i32
  }
  func.func @transform_4(%arg0: i32, %arg1: i32) -> (i32, i32) {
    %c0_i32 = arith.constant 0 : i32
    %c0_i32_0 = arith.constant 0 : i32
    return %arg0, %c0_i32 : i32, i32
  }
}

</mosaic_0001>

<llo_original>
// kernel: tpu_custom_call.1
$region0: #{tpu_custom_call.1}
  #allocation0 [shape = 'u32[]', space=smem, size = 0x4, offset = 0x4, fixed_abs, tag = 'smem constant byte address 0x4 - core index']
  #allocation1 [shape = 'u32[144,128]{1,0:T(1,128)}', space=vmem, size = 0x12000, scoped, tag = 'internal scratch']
  #allocation2 [shape = 'f32[2,1]{1,0:T(2,128)}', space=vmem, size = 0x400, scoped, tag = 'scratch operand']
  #allocation3 [shape = 'f32[2,1]{1,0:T(2,128)}', space=vmem, size = 0x400, scoped, tag = 'scratch operand']
  #allocation4 [shape = 'f32[2,32]{1,0:T(2,128)}', space=vmem, size = 0x400, scoped, tag = 'scratch operand']
  %s0 = inlined_call_operand.vmem [shape: f32[2,8,32], index: 0, kind: input, shape index: {}]
  %s1 = inlined_call_operand.vmem [shape: f32[32,1], index: 1, kind: input, shape index: {}]
  %s2 = inlined_call_operand.vmem [shape: f32[32,4], index: 2, kind: input, shape index: {}]
  %s3 = inlined_call_operand.vmem [shape: f32[1,4], index: 3, kind: input, shape index: {}]
  %s4 = inlined_call_operand.hbm [shape: f32[2,4], index: 4, kind: output, shape index: {}]
  %s5 = sld [smem:[#allocation0]]
  $region34: #{tpu_custom_call.1} parent=0
    _
  %s7 = ssub.s32 1, %s5
  %s8 = scalar_select 0, %s7, %s5
  $region1: #{tpu_custom_call.1} parent=0
    #allocation5 [shape = 'u8[1024]{0}', space=vmem, size = 0x400, scoped, tag = 'output window, operand 0, single buffered']
    #allocation6 [shape = 's32[1]{0}', space=sflag, size = 0x4, scoped, tag = 'scoped memory for tpu_custom_call.1']
    %9 = vsyncpa [#allocation6], 0
    // Predicated region
    $region2: #{tpu_custom_call.1} parent=1 // pred_check
      _
    $region3: #{tpu_custom_call.1} parent=1 // pred_check_branch
      %11 = sbr.rel (0) target = $region5
    $region4: #{tpu_custom_call.1} parent=1 // pred_region
      _
    $region5: #{tpu_custom_call.1} parent=1 // pred_fallthru
      _
    // Predicated region
    $region6: #{tpu_custom_call.1} parent=1 // pred_check
      _
    $region7: #{tpu_custom_call.1} parent=1 // pred_check_branch
      %13 = sbr.rel (0) target = $region9
    $region8: #{tpu_custom_call.1} parent=1 // pred_region
      _
    $region9: #{tpu_custom_call.1} parent=1 // pred_fallthru
      _
    // Predicated region
    $region10: #{tpu_custom_call.1} parent=1 // pred_check
      _
    $region11: #{tpu_custom_call.1} parent=1 // pred_check_branch
      %15 = sbr.rel (0) target = $region13
    $region12: #{tpu_custom_call.1} parent=1 // pred_region
      _
    $region13: #{tpu_custom_call.1} parent=1 // pred_fallthru
      _
    // Predicated region
    $region14: #{tpu_custom_call.1} parent=1 // pred_check
      _
    $region15: #{tpu_custom_call.1} parent=1 // pred_check_branch
      %17 = sbr.rel (0) target = $region17
    $region16: #{tpu_custom_call.1} parent=1 // pred_region
      _
    $region17: #{tpu_custom_call.1} parent=1 // pred_fallthru
      _
    %p18 = scmp.eq.s32.totalorder 0, 0
    // Predicated region
    $region18: #{tpu_custom_call.1} parent=1 // pred_check
      %p19 = pneg %p18
    $region19: #{tpu_custom_call.1} parent=1 // pred_check_branch
      %21 = sbr.rel (%p19) target = $region21
    $region20: #{tpu_custom_call.1} parent=1 // pred_region
      %vm22 = vcmask 1024
      %23 = vst.msk [vmem:[#allocation2] sm:$0x3] %vm22, -inf
      %24 = vst.msk [vmem:[#allocation3] sm:$0x3] %vm22, 0.0
      %vm25 = vcmask 254976
      %26 = vst.msk [vmem:[#allocation4] sm:$0x3] %vm25, 0.0
    $region21: #{tpu_custom_call.1} parent=1 // pred_fallthru
      _
    %v27 = vld [vmem:[%s0] sm:$0xff]
    %v28 = vld [vmem:[%s0 + $0x8] sm:$0xff]
    %v29 = vld [vmem:[%s1] sm:$0xff]
    %v30 = vld [vmem:[%s1 + $0x8] sm:$0xff]
    %v31 = vld [vmem:[%s1 + $0x10] sm:$0xff]
    %v32 = vld [vmem:[%s1 + $0x18] sm:$0xff]
    %vm33 = vcmask 261120
    %v35 = vsel %vm33, %v27, 0
    %v38 = vsel %vm33, %v28, 0
    %40 = vmatprep.subr.mxu0 0.0
    %41 = vmatpush1.msra.mxu0 %v29
    %42 = vmatprep.subr.mxu0 0.0
    %43 = vmatpush1.msra.mxu0 %v30
    %44 = vmatprep.subr.mxu0 0.0
    %45 = vmatpush1.msra.mxu0 %v31
    %46 = vmatprep.subr.mxu0 0.0
    %47 = vmatpush1.msra.mxu0 %v32
    %48 = vmatprep.subr.mxu0 0.0
    %49 = vmatpush1.msra.mxu0 0.0
    %50 = vmatprep.subr.mxu0 0.0
    %51 = vmatpush1.msra.mxu0 0.0
    %52 = vmatprep.subr.mxu0 0.0
    %53 = vmatpush1.msra.mxu0 0.0
    %54 = vmatprep.subr.mxu0 0.0
    %55 = vmatpush1.msra.mxu0 0.0
    %56 = vmatprep.subr.mxu0 0.0
    %57 = vmatpush1.msra.mxu0 0.0
    %58 = vmatprep.subr.mxu0 0.0
    %59 = vmatpush1.msra.mxu0 0.0
    %60 = vmatprep.subr.mxu0 0.0
    %61 = vmatpush1.msra.mxu0 0.0
    %62 = vmatprep.subr.mxu0 0.0
    %63 = vmatpush1.msra.mxu0 0.0
    %64 = vmatprep.subr.mxu0 0.0
    %65 = vmatpush1.msra.mxu0 0.0
    %66 = vmatprep.subr.mxu0 0.0
    %67 = vmatpush1.msra.mxu0 0.0
    %68 = vmatprep.subr.mxu0 0.0
    %69 = vmatpush1.msra.mxu0 0.0
    %70 = vmatprep.subr.mxu0 0.0
    %71 = vmatpush1.msra.mxu0 0.0
    %72 = vmatprep.subr.mxu0 0.0
    %73 = vmatpush1.msra.mxu0 0.0
    %74 = vmatprep.subr.mxu0 0.0
    %75 = vmatpush1.msra.mxu0 0.0
    %76 = vmatprep.subr.mxu0 0.0
    %77 = vmatpush1.msra.mxu0 0.0
    %78 = vmatprep.subr.mxu0 0.0
    %79 = vmatpush1.msra.mxu0 0.0
    %80 = vmatprep.subr.mxu0 0.0
    %81 = vmatpush1.msra.mxu0 0.0
    %82 = vmatprep.subr.mxu0 0.0
    %83 = vmatpush1.msra.mxu0 0.0
    %84 = vmatprep.subr.mxu0 0.0
    %85 = vmatpush1.msra.mxu0 0.0
    %86 = vmatprep.subr.mxu0 0.0
    %87 = vmatpush1.msra.mxu0 0.0
    %88 = vmatprep.subr.mxu0 0.0
    %89 = vmatpush1.msra.mxu0 0.0
    %90 = vmatprep.subr.mxu0 0.0
    %91 = vmatpush1.msra.mxu0 0.0
    %92 = vmatprep.subr.mxu0 0.0
    %93 = vmatpush1.msra.mxu0 0.0
    %94 = vmatprep.subr.mxu0 0.0
    %95 = vmatpush1.msra.mxu0 0.0
    %96 = vmatprep.subr.mxu0 0.0
    %97 = vmatpush1.msra.mxu0 0.0
    %98 = vmatprep.subr.mxu0 0.0
    %99 = vmatpush1.msra.mxu0 0.0
    %100 = vmatprep.subr.mxu0 0.0
    %101 = vmatpush1.msra.mxu0 0.0
    %102 = vmatprep.subr.mxu0 0.0
    %103 = vmatpush1.msra.mxu0 0.0
    %104 = vmatprep.mubr.f32.mxu0 0.0
    %105 = vmatmul.mubr.f32.gmra.mrb[0].mxu0 %v35
    %v106 = vpop.f32.mrb[0].mxu0
    %v107 = vadd.f32 0.0, %v106
    %v108 = vpop.f32.mrb[0].mxu0
    %109 = vmatprep.mubr.f32.mxu0 0.0
    %110 = vmatmul.mubr.f32.gmra.mrb[0].mxu0 %v38
    %v111 = vpop.f32.mrb[0].mxu0
    %v112 = vadd.f32 0.0, %v111
    %v113 = vpop.f32.mrb[0].mxu0
    %114 = vdwg.mxu0
    %v115 = vld [vmem:[#allocation2] sm:$0x3]
    %118 = vset.pattern.permute.xlu0 0
    %119 = vperm.xlu0 %118, %v107
    %v120 = vpop.permute.xlu0 %119
    %121 = vset.pattern.permute.xlu0 0
    %122 = vperm.xlu0 %121, %v112
    %v123 = vpop.permute.xlu0 %122
    %v124 = vlaneseq
    %v125 = vand.u32 %v124, 127
    %v126 = vlaneseq
    %v127 = vshrl.u32 %v126, 7
    %v128 = vsub.s32 %v125, %v127
    %v129 = vrot.slane %v120, %v128
    %v130 = vlaneseq
    %v131 = vshrl.u32 %v130, 7
    %v132 = vsub.s32 %v125, %v131
    %v133 = vrot.slane %v123, %v132
    %vm134 = vcmask 1041409
    %v135 = vsel %vm134, %v133, %v129
    %vm137 = vcmask 58368
    %v138 = vsel %vm137, %v135, -inf
    %139 = vmax.xlane.f32.xlu0 %v138
    %v140 = vpop.xlane.xlu0 %139
    %v141 = vmax.f32 %v115, %v140
    %v142 = vsub.f32 %v115, %v141
    %v143 = vmul.f32 %v142, 1.442695
    %v144 = vpow.pop %v143
    %146 = vset.pattern.permute.xlu0 0
    %147 = vperm.xlu0 %146, %v141
    %v148 = vpop.permute.xlu0 %147
    %v149 = vlaneseq
    %v150 = vshrl.u32 %v149, 7
    %v151 = vsub.s32 0, %v150
    %v152 = vrot.slane %v148, %v151
    %v153 = vlaneseq
    %v154 = vshrl.u32 %v153, 7
    %v155 = vsub.s32 1, %v154
    %v156 = vrot.slane %v148, %v155
    %v159 = vsub.f32 %v107, %v152
    %v160 = vsub.f32 %v112, %v156
    %v161 = vmul.f32 %v159, 1.442695
    %v162 = vpow.pop %v161
    %v163 = vmul.f32 %v160, 1.442695
    %v164 = vpow.pop %v163
    %v165 = vld [vmem:[#allocation3] sm:$0x3]
    %v166 = vmul.f32 %v144, %v165
    %169 = vset.pattern.permute.xlu0 0
    %170 = vperm.xlu0 %169, %v162
    %v171 = vpop.permute.xlu0 %170
    %172 = vset.pattern.permute.xlu0 0
    %173 = vperm.xlu0 %172, %v164
    %v174 = vpop.permute.xlu0 %173
    %v175 = vlaneseq
    %v176 = vshrl.u32 %v175, 7
    %v177 = vsub.s32 %v125, %v176
    %v178 = vrot.slane %v171, %v177
    %v179 = vlaneseq
    %v180 = vshrl.u32 %v179, 7
    %v181 = vsub.s32 %v125, %v180
    %v182 = vrot.slane %v174, %v181
    %v183 = vsel %vm134, %v182, %v178
    %v185 = vsel %vm137, %v183, 0.0
    %186 = vadd.xlane.f32.xlu0 %v185
    %v187 = vpop.xlane.xlu0 %186
    %v188 = vadd.f32 %v166, %v187
    %vm189 = vcmask 1024
    %190 = vst.msk [vmem:[#allocation3] sm:$0x3] %vm189, %v188
    %v193 = vmul.f32 %v27, %v171
    %v194 = vmul.f32 %v28, %v174
    %v195 = vsel %vm33, %v193, 0.0
    %v196 = vrot.slane %v195, 4
    %v197 = vadd.f32 %v195, %v196
    %v198 = vrot.slane %v197, 2
    %v199 = vadd.f32 %v197, %v198
    %v200 = vrot.slane %v199, 1
    %v201 = vadd.f32 %v199, %v200
    %v202 = vsel %vm33, %v194, 0.0
    %v203 = vrot.slane %v202, 4
    %v204 = vadd.f32 %v202, %v203
    %v205 = vrot.slane %v204, 2
    %v206 = vadd.f32 %v204, %v205
    %v207 = vrot.slane %v206, 1
    %v208 = vadd.f32 %v206, %v207
    %v209 = vld [vmem:[#allocation4] sm:$0x3]
    %211 = vset.pattern.permute.xlu0 0
    %212 = vperm.xlu0 %211, %v144
    %v213 = vpop.permute.xlu0 %212
    %v215 = vmul.f32 %v213, %v209
    %v218 = vsel %vm134, %v208, %v201
    %v220 = vadd.f32 %v215, %v218
    %vm221 = vcmask 254976
    %222 = vst.msk [vmem:[#allocation4] sm:$0x3] %vm221, %v220
    %223 = vst.msk [vmem:[#allocation2] sm:$0x3] %vm189, %v141
    // Predicated region
    $region22: #{tpu_custom_call.1} parent=1 // pred_check
      %p224 = pneg %p18
    $region23: #{tpu_custom_call.1} parent=1 // pred_check_branch
      %226 = sbr.rel (%p224) target = $region25
    $region24: #{tpu_custom_call.1} parent=1 // pred_region
      %v227 = vld [vmem:[#allocation4] sm:$0x3]
      %v228 = vld [vmem:[#allocation3] sm:$0x3]
      %230 = vset.pattern.permute.xlu0 0
      %231 = vperm.xlu0 %230, %v228
      %v232 = vpop.permute.xlu0 %231
      %v234 = vrcp.pop %v232
      %v235 = vmul.f32 %v227, %v234
      %v236 = vld [vmem:[%s2] sm:$0xff]
      %v237 = vld [vmem:[%s2 + $0x8] sm:$0xff]
      %v238 = vld [vmem:[%s2 + $0x10] sm:$0xff]
      %v239 = vld [vmem:[%s2 + $0x18] sm:$0xff]
      %v240 = vld [vmem:[%s3] sm:$0x1]
      %v242 = vlaneseq
      %v243 = vshrl.u32 %v242, 7
      %v244 = vsub.s32 0, %v243
      %v245 = vrot.slane %v240, %v244
      %v248 = vsel %vm33, %v235, 0
      %250 = vmatprep.subr.mxu0 0.0
      %251 = vmatpush1.msra.mxu0 %v236
      %252 = vmatprep.subr.mxu0 0.0
      %253 = vmatpush1.msra.mxu0 %v237
      %254 = vmatprep.subr.mxu0 0.0
      %255 = vmatpush1.msra.mxu0 %v238
      %256 = vmatprep.subr.mxu0 0.0
      %257 = vmatpush1.msra.mxu0 %v239
      %258 = vmatprep.subr.mxu0 0.0
      %259 = vmatpush1.msra.mxu0 0.0
      %260 = vmatprep.subr.mxu0 0.0
      %261 = vmatpush1.msra.mxu0 0.0
      %262 = vmatprep.subr.mxu0 0.0
      %263 = vmatpush1.msra.mxu0 0.0
      %264 = vmatprep.subr.mxu0 0.0
      %265 = vmatpush1.msra.mxu0 0.0
      %266 = vmatprep.subr.mxu0 0.0
      %267 = vmatpush1.msra.mxu0 0.0
      %268 = vmatprep.subr.mxu0 0.0
      %269 = vmatpush1.msra.mxu0 0.0
      %270 = vmatprep.subr.mxu0 0.0
      %271 = vmatpush1.msra.mxu0 0.0
      %272 = vmatprep.subr.mxu0 0.0
      %273 = vmatpush1.msra.mxu0 0.0
      %274 = vmatprep.subr.mxu0 0.0
      %275 = vmatpush1.msra.mxu0 0.0
      %276 = vmatprep.subr.mxu0 0.0
      %277 = vmatpush1.msra.mxu0 0.0
      %278 = vmatprep.subr.mxu0 0.0
      %279 = vmatpush1.msra.mxu0 0.0
      %280 = vmatprep.subr.mxu0 0.0
      %281 = vmatpush1.msra.mxu0 0.0
      %282 = vmatprep.subr.mxu0 0.0
      %283 = vmatpush1.msra.mxu0 0.0
      %284 = vmatprep.subr.mxu0 0.0
      %285 = vmatpush1.msra.mxu0 0.0
      %286 = vmatprep.subr.mxu0 0.0
      %287 = vmatpush1.msra.mxu0 0.0
      %288 = vmatprep.subr.mxu0 0.0
      %289 = vmatpush1.msra.mxu0 0.0
      %290 = vmatprep.subr.mxu0 0.0
      %291 = vmatpush1.msra.mxu0 0.0
      %292 = vmatprep.subr.mxu0 0.0
      %293 = vmatpush1.msra.mxu0 0.0
      %294 = vmatprep.subr.mxu0 0.0
      %295 = vmatpush1.msra.mxu0 0.0
      %296 = vmatprep.subr.mxu0 0.0
      %297 = vmatpush1.msra.mxu0 0.0
      %298 = vmatprep.subr.mxu0 0.0
      %299 = vmatpush1.msra.mxu0 0.0
      %300 = vmatprep.subr.mxu0 0.0
      %301 = vmatpush1.msra.mxu0 0.0
      %302 = vmatprep.subr.mxu0 0.0
      %303 = vmatpush1.msra.mxu0 0.0
      %304 = vmatprep.subr.mxu0 0.0
      %305 = vmatpush1.msra.mxu0 0.0
      %306 = vmatprep.subr.mxu0 0.0
      %307 = vmatpush1.msra.mxu0 0.0
      %308 = vmatprep.subr.mxu0 0.0
      %309 = vmatpush1.msra.mxu0 0.0
      %310 = vmatprep.subr.mxu0 0.0
      %311 = vmatpush1.msra.mxu0 0.0
      %312 = vmatprep.subr.mxu0 0.0
      %313 = vmatpush1.msra.mxu0 0.0
      %314 = vmatprep.mubr.f32.mxu0 0.0
      %315 = vmatmul.mubr.f32.gmra.mrb[0].mxu0 %v248
      %v316 = vpop.f32.mrb[0].mxu0
      %v317 = vadd.f32 %v245, %v316
      %v318 = vpop.f32.mrb[0].mxu0
      %319 = vdwg.mxu0
      %vm320 = vcmask 25600
      %v321 = vsel %vm320, %v317, -inf
      %322 = vmax.xlane.f32.xlu0 %v321
      %v323 = vpop.xlane.xlu0 %322
      %v324 = vsub.f32 %v317, %v323
      %v325 = vmul.f32 %v324, 1.442695
      %v326 = vpow.pop %v325
      %v327 = vsel %vm320, %v326, 0.0
      %328 = vadd.xlane.f32.xlu0 %v327
      %v329 = vpop.xlane.xlu0 %328
      %v330 = vlog2.pop %v329
      %v331 = vmul.f32 %v330, 0.6931472
      %v332 = vsub.f32 %v324, %v331
      %333 = vst.msk [vmem:[#allocation5] sm:$0x3] %vm320, %v332
    $region25: #{tpu_custom_call.1} parent=1 // pred_fallthru
      _
    // Predicated region
    $region26: #{tpu_custom_call.1} parent=1 // pred_check
      _
    $region27: #{tpu_custom_call.1} parent=1 // pred_check_branch
      %335 = sbr.rel (0) target = $region29
    $region28: #{tpu_custom_call.1} parent=1 // pred_region
      %s337 = ssub.s32 32, 32
      %338 = vsyncadd [#allocation6], %s337
      %s340 = sshll.u32 [#allocation5], 4
      %s341 = int_to_ptr.vmem [resolvable:$true] %s340
      %343 = dma.vmem_to_hbm [thread:$0]  %s341, 32, %s4, [#allocation6]
    $region29: #{tpu_custom_call.1} parent=1 // pred_fallthru
      _
    // Predicated region
    $region30: #{tpu_custom_call.1} parent=1 // pred_check
      _
    $region31: #{tpu_custom_call.1} parent=1 // pred_check_branch
      %345 = sbr.rel (0) target = $region33
    $region32: #{tpu_custom_call.1} parent=1 // pred_region
      %346 = dma.done [#allocation6], 32
    $region33: #{tpu_custom_call.1} parent=1 // pred_fallthru
      _
    %347 = vsyncpa [#allocation6], 1

</llo_original>
